<compile_context>
chip_gen: v7x
topology: tpu7x:2x2x1
jax: 0.10.0
libtpu: 0.0.40
codegen_flags: <defaults>
</compile_context>

<pallas_src>
import functools

import jax
import jax.numpy as jnp
from jax.experimental import pallas as pl
from jax.experimental.pallas import tpu as pltpu


def _round_up(x, m):
    return (x + m - 1) // m * m


def prepare_params(w1, b1, w2, b2):
    """One-time parameter prep: pad hidden dim to 128 lanes, cast weights to bf16.

    w1 : [D_in, H]  (= PyTorch lin1.weight.T)
    b1 : [H]
    w2 : [H, H]     (= PyTorch lin2.weight.T)
    b2 : [H]
    Returns padded (w1_p[D_in,Hp] bf16, b1_p[1,Hp] f32, w2_p[Hp,Hp] bf16,
    b2_p[1,Hp] f32). Zero padding is exact: padded hidden columns stay 0
    through ReLU and hit zero W2 rows.
    """
    D_in, H = w1.shape
    assert b1.shape == (H,) and w2.shape == (H, H) and b2.shape == (H,)
    Hp = _round_up(H, 128)
    w1_p = jnp.zeros((D_in, Hp), jnp.bfloat16).at[:, :H].set(w1.astype(jnp.bfloat16))
    b1_p = jnp.zeros((1, Hp), jnp.float32).at[0, :H].set(b1.astype(jnp.float32))
    w2_p = jnp.zeros((Hp, Hp), jnp.bfloat16).at[:H, :H].set(w2.astype(jnp.bfloat16))
    b2_p = jnp.zeros((1, Hp), jnp.float32).at[0, :H].set(b2.astype(jnp.float32))
    return w1_p, b1_p, w2_p, b2_p


def _mlp_kernel(x_ref, w1_ref, b1_ref, w2_ref, b2_ref, o_ref, *, grayscale):
    if grayscale:
        x = x_ref[...]                       # (tm, 2, 196) f32
        feat = (x[:, 0, :] + x[:, 1, :]).astype(jnp.bfloat16)   # channel-sum on VPU
    else:
        feat = x_ref[...].astype(jnp.bfloat16)                   # (tm, 392)
    # lin1 + ReLU: bf16 MXU matmul, f32 accumulation, f32 bias + max on VPU.
    h = jnp.dot(feat, w1_ref[...], preferred_element_type=jnp.float32)
    h = jnp.maximum(h + b1_ref[...], 0.0)
    # lin2 + ReLU, fused (hidden activation never leaves VMEM).
    h = jnp.dot(h.astype(jnp.bfloat16), w2_ref[...],
                preferred_element_type=jnp.float32)
    o_ref[...] = jnp.maximum(h + b2_ref[...], 0.0).astype(o_ref.dtype)


def cmnist_mlp_forward(x, w1_p, b1_p, w2_p, b2_p, *, hidden_dim,
                       grayscale_model=False, block_m=512):
    """Pallas implementation of CMNIST_MLP.forward.

    x : [B, 2, 14, 14] float32.  Parameters are the pre-padded outputs of
    `prepare_params` (padding/casting is NOT in the per-call path).
    Returns [B, hidden_dim] float32.
    """
    B = x.shape[0]
    Hp = w1_p.shape[1]
    D_in = w1_p.shape[0]

    if grayscale_model:
        assert D_in == 14 * 14
        feat_in = x.reshape(B, 2, 14 * 14)          # free view; summed in-kernel
        x_block = lambda tm: (tm, 2, D_in)
        x_index = lambda i: (i, 0, 0)
    else:
        assert D_in == 2 * 14 * 14
        feat_in = x.reshape(B, 2 * 14 * 14)         # free view
        x_block = lambda tm: (tm, D_in)
        x_index = lambda i: (i, 0)

    # Batch tiling: multiples of 8 sublanes, ragged last block (no batch pad).
    if B < 8:
        tm = B                                       # block == full batch dim
    else:
        tm = min(block_m, max(8, (B // 8) * 8))
        # v7x: ensure >= 2 batch blocks so the "parallel" axis shards across
        # both TensorCores (no-op on single-TC v5e/v6e).
        if B >= 16 and pl.cdiv(B, tm) == 1:
            tm = max(8, ((B // 2) // 8) * 8)
    grid = (pl.cdiv(B, tm),)

    itemsize = jnp.dtype(x.dtype).itemsize
    cost = pl.CostEstimate(
        flops=2 * B * (D_in * Hp + Hp * Hp),
        transcendentals=0,
        bytes_accessed=(feat_in.size * itemsize      # x read
                        + w1_p.size * 2 + w2_p.size * 2
                        + b1_p.size * 4 + b2_p.size * 4
                        + B * Hp * 4),               # output write
    )

    out_p = pl.pallas_call(
        functools.partial(_mlp_kernel, grayscale=grayscale_model),
        out_shape=jax.ShapeDtypeStruct((B, Hp), jnp.float32),
        grid_spec=pltpu.PrefetchScalarGridSpec(
            num_scalar_prefetch=0,
            grid=grid,
            in_specs=[
                pl.BlockSpec(x_block(tm), x_index),          # x tile (batch-tiled)
                pl.BlockSpec((D_in, Hp), lambda i: (0, 0)),  # W1 (resident)
                pl.BlockSpec((1, Hp), lambda i: (0, 0)),     # b1 (resident)
                pl.BlockSpec((Hp, Hp), lambda i: (0, 0)),    # W2 (resident)
                pl.BlockSpec((1, Hp), lambda i: (0, 0)),     # b2 (resident)
            ],
            out_specs=pl.BlockSpec((tm, Hp), lambda i: (i, 0)),
        ),
        compiler_params=pltpu.CompilerParams(
            dimension_semantics=("parallel",),
        ),
        cost_estimate=cost,
    )(feat_in, w1_p, b1_p, w2_p, b2_p)

    return out_p[:, :hidden_dim]


if __name__ == "__main__":
    batch = 2
    hidden = 32   # hparams['hidden_dim']; params are padded to 128 lanes once

    key = jax.random.PRNGKey(0)
    kx, k1, kb1, k2, kb2, k1g = jax.random.split(key, 6)

    x = jax.random.normal(kx, (batch, 2, 14, 14), dtype=jnp.float32)

    # Deterministic synthetic parameters.  The PyTorch module uses
    # xavier_uniform weights and ZERO biases; small random biases are used so
    # the bias-add path is actually exercised (still deterministic).
    d_in = 2 * 14 * 14
    w1 = jax.random.normal(k1, (d_in, hidden), jnp.float32) / jnp.sqrt(float(d_in))
    b1 = 0.1 * jax.random.normal(kb1, (hidden,), jnp.float32)
    w2 = jax.random.normal(k2, (hidden, hidden), jnp.float32) / jnp.sqrt(float(hidden))
    b2 = 0.1 * jax.random.normal(kb2, (hidden,), jnp.float32)

    # ---- color model -------------------------------------------------------
    params = prepare_params(w1, b1, w2, b2)          # one-time pad + bf16 cast
    fwd = jax.jit(functools.partial(
        cmnist_mlp_forward, hidden_dim=hidden, grayscale_model=False))
    out = jax.block_until_ready(fwd(x, *params))

    feat = x.reshape(batch, d_in)
    ref = jnp.maximum(jnp.maximum(feat @ w1 + b1, 0.0) @ w2 + b2, 0.0)
    assert out.shape == (batch, hidden)
    # bf16 MXU inputs with f32 accumulation -> loosened tolerance.
    assert jnp.allclose(out, ref, atol=5e-2, rtol=5e-2), "mismatch vs reference (color)"

    # ---- grayscale model (channel-sum done inside the kernel) --------------
    d_in_g = 14 * 14
    w1_g = jax.random.normal(k1g, (d_in_g, hidden), jnp.float32) / jnp.sqrt(float(d_in_g))
    params_g = prepare_params(w1_g, b1, w2, b2)
    fwd_g = jax.jit(functools.partial(
        cmnist_mlp_forward, hidden_dim=hidden, grayscale_model=True))
    out_g = jax.block_until_ready(fwd_g(x, *params_g))

    feat_g = x.reshape(batch, 2, d_in_g).sum(axis=1)
    ref_g = jnp.maximum(jnp.maximum(feat_g @ w1_g + b1, 0.0) @ w2 + b2, 0.0)
    assert out_g.shape == (batch, hidden)
    assert jnp.allclose(out_g, ref_g, atol=5e-2, rtol=5e-2), "mismatch vs reference (gray)"

    print("KERNEL_OK")
</pallas_src>

<mosaic_0001>
module attributes {stable_mosaic.version = 11 : i64} {
  func.func @_mlp_kernel(%arg0: i32, %arg1: memref<2x392xf32, #tpu.memory_space<vmem>>, %arg2: memref<392x128xbf16, #tpu.memory_space<vmem>>, %arg3: memref<1x128xf32, #tpu.memory_space<vmem>>, %arg4: memref<128x128xbf16, #tpu.memory_space<vmem>>, %arg5: memref<1x128xf32, #tpu.memory_space<vmem>>, %arg6: memref<2x128xf32, #tpu.memory_space<vmem>>) attributes {dimension_semantics = [#tpu.dimension_semantics<parallel>], iteration_bounds = array<i64: 1>, scalar_prefetch = 0 : i64, scratch_operands = 0 : i64, tpu.core_type = #tpu.core_type<tc>, window_params = [{transform_indices = @transform_0, window_bounds = array<i64: 2, 392>}, {pipeline_mode = #tpu.pipeline_mode<synchronous>, transform_indices = @transform_1, window_bounds = array<i64: 392, 128>}, {pipeline_mode = #tpu.pipeline_mode<synchronous>, transform_indices = @transform_2, window_bounds = array<i64: 1, 128>}, {pipeline_mode = #tpu.pipeline_mode<synchronous>, transform_indices = @transform_3, window_bounds = array<i64: 128, 128>}, {pipeline_mode = #tpu.pipeline_mode<synchronous>, transform_indices = @transform_4, window_bounds = array<i64: 1, 128>}, {transform_indices = @transform_5, window_bounds = array<i64: 2, 128>}]} {
    %c0 = arith.constant 0 : index
    %c0_0 = arith.constant 0 : index
    %0 = vector.load %arg1[%c0, %c0_0] : memref<2x392xf32, #tpu.memory_space<vmem>>, vector<2x392xf32>
    %1 = arith.truncf %0 : vector<2x392xf32> to vector<2x392xbf16>
    %c0_1 = arith.constant 0 : index
    %c0_2 = arith.constant 0 : index
    %2 = vector.load %arg2[%c0_1, %c0_2] : memref<392x128xbf16, #tpu.memory_space<vmem>>, vector<392x128xbf16>
    %cst = arith.constant dense<0.000000e+00> : vector<2x128xf32>
    %3 = tpu.matmul %1, %2, %cst {dimension_numbers = #tpu.dot_dimension_numbers<[1], [0], [0], [1], [0, 0, 1, 1], [], []>} : vector<2x392xbf16>, vector<392x128xbf16>, vector<2x128xf32> -> vector<2x128xf32>
    %c0_3 = arith.constant 0 : index
    %c0_4 = arith.constant 0 : index
    %4 = vector.load %arg3[%c0_3, %c0_4] : memref<1x128xf32, #tpu.memory_space<vmem>>, vector<1x128xf32>
    %5 = vector.broadcast %4 : vector<1x128xf32> to vector<2x128xf32>
    %6 = arith.addf %3, %5 : vector<2x128xf32>
    %cst_5 = arith.constant 0.000000e+00 : f32
    %7 = vector.broadcast %cst_5 : f32 to vector<2x128xf32>
    %8 = arith.maximumf %6, %7 : vector<2x128xf32>
    %9 = arith.truncf %8 : vector<2x128xf32> to vector<2x128xbf16>
    %c0_6 = arith.constant 0 : index
    %c0_7 = arith.constant 0 : index
    %10 = vector.load %arg4[%c0_6, %c0_7] : memref<128x128xbf16, #tpu.memory_space<vmem>>, vector<128x128xbf16>
    %cst_8 = arith.constant dense<0.000000e+00> : vector<2x128xf32>
    %11 = tpu.matmul %9, %10, %cst_8 {dimension_numbers = #tpu.dot_dimension_numbers<[1], [0], [0], [1], [0, 0, 1, 1], [], []>} : vector<2x128xbf16>, vector<128x128xbf16>, vector<2x128xf32> -> vector<2x128xf32>
    %c0_9 = arith.constant 0 : index
    %c0_10 = arith.constant 0 : index
    %12 = vector.load %arg5[%c0_9, %c0_10] : memref<1x128xf32, #tpu.memory_space<vmem>>, vector<1x128xf32>
    %13 = vector.broadcast %12 : vector<1x128xf32> to vector<2x128xf32>
    %14 = arith.addf %11, %13 : vector<2x128xf32>
    %cst_11 = arith.constant 0.000000e+00 : f32
    %15 = vector.broadcast %cst_11 : f32 to vector<2x128xf32>
    %16 = arith.maximumf %14, %15 : vector<2x128xf32>
    %c0_12 = arith.constant 0 : index
    %c0_13 = arith.constant 0 : index
    %17 = vector.load %arg6[%c0_12, %c0_13] : memref<2x128xf32, #tpu.memory_space<vmem>>, vector<2x128xf32>
    tpu.vector_store %arg6[%c0_12, %c0_13], %16 {strides = array<i32>} : memref<2x128xf32, #tpu.memory_space<vmem>>, vector<2x128xf32>,
    return
  }
  func.func @transform_0(%arg0: i32) -> (i32, i32) {
    %c0_i32 = arith.constant 0 : i32
    %c0_i32_0 = arith.constant 0 : i32
    return %arg0, %c0_i32 : i32, i32
  }
  func.func @transform_1(%arg0: i32) -> (i32, i32) {
    %c0_i32 = arith.constant 0 : i32
    %c0_i32_0 = arith.constant 0 : i32
    %c0_i32_1 = arith.constant 0 : i32
    return %c0_i32, %c0_i32_0 : i32, i32
  }
  func.func @transform_2(%arg0: i32) -> (i32, i32) {
    %c0_i32 = arith.constant 0 : i32
    %c0_i32_0 = arith.constant 0 : i32
    %c0_i32_1 = arith.constant 0 : i32
    return %c0_i32, %c0_i32_0 : i32, i32
  }
  func.func @transform_3(%arg0: i32) -> (i32, i32) {
    %c0_i32 = arith.constant 0 : i32
    %c0_i32_0 = arith.constant 0 : i32
    %c0_i32_1 = arith.constant 0 : i32
    return %c0_i32, %c0_i32_0 : i32, i32
  }
  func.func @transform_4(%arg0: i32) -> (i32, i32) {
    %c0_i32 = arith.constant 0 : i32
    %c0_i32_0 = arith.constant 0 : i32
    %c0_i32_1 = arith.constant 0 : i32
    return %c0_i32, %c0_i32_0 : i32, i32
  }
  func.func @transform_5(%arg0: i32) -> (i32, i32) {
    %c0_i32 = arith.constant 0 : i32
    %c0_i32_0 = arith.constant 0 : i32
    return %arg0, %c0_i32 : i32, i32
  }
}

</mosaic_0001>

<llo_original>
// kernel: cmnist_mlp_forward.1
$region0: #{cmnist_mlp_forward.1}
  #allocation0 [shape = 'u32[]', space=smem, size = 0x4, offset = 0x4, fixed_abs, tag = 'smem constant byte address 0x4 - core index']
  #allocation1 [shape = 'u32[144,128]{1,0:T(1,128)}', space=vmem, size = 0x12000, scoped, tag = 'internal scratch']
  %s0 = inlined_call_operand.vmem [shape: f32[2,392], index: 0, kind: input, shape index: {}]
  %s1 = inlined_call_operand.hbm [shape: bf16[392,128], index: 1, kind: input, shape index: {}]
  %s2 = inlined_call_operand.vmem [shape: f32[1,128], index: 2, kind: input, shape index: {}]
  %s3 = inlined_call_operand.vmem [shape: bf16[128,128], index: 3, kind: input, shape index: {}]
  %s4 = inlined_call_operand.vmem [shape: f32[1,128], index: 4, kind: input, shape index: {}]
  %s5 = inlined_call_operand.hbm [shape: f32[2,128], index: 5, kind: output, shape index: {}]
  %s6 = sld [smem:[#allocation0]]
  $region34: #{cmnist_mlp_forward.1} parent=0
    _
  %s8 = ssub.s32 1, %s6
  %s9 = scalar_select 0, %s8, %s6
  $region1: #{cmnist_mlp_forward.1} parent=0
    #allocation2 [shape = 'u8[100352]{0}', space=vmem, size = 0x18800, scoped, tag = 'input window, operand 1, single buffered']
    #allocation3 [shape = 's32[1]{0}', space=sflag, size = 0x4, scoped, tag = 'scoped memory for cmnist_mlp_forward.1']
    #allocation4 [shape = 's32[1]{0}', space=sflag, size = 0x4, scoped, tag = 'scoped memory for cmnist_mlp_forward.1']
    #allocation5 [shape = 'u8[1024]{0}', space=vmem, size = 0x400, scoped, tag = 'output window, operand 0, single buffered']
    %10 = vsyncpa [#allocation3], 0
    %11 = vsyncpa [#allocation4], 0
    // Predicated region
    $region2: #{cmnist_mlp_forward.1} parent=1 // pred_check
      _
    $region3: #{cmnist_mlp_forward.1} parent=1 // pred_check_branch
      %13 = sbr.rel (0) target = $region5
    $region4: #{cmnist_mlp_forward.1} parent=1 // pred_region
      _
    $region5: #{cmnist_mlp_forward.1} parent=1 // pred_fallthru
      _
    // Predicated region
    $region6: #{cmnist_mlp_forward.1} parent=1 // pred_check
      _
    $region7: #{cmnist_mlp_forward.1} parent=1 // pred_check_branch
      %15 = sbr.rel (0) target = $region9
    $region8: #{cmnist_mlp_forward.1} parent=1 // pred_region
      %s17 = ssub.s32 3136, 3136
      %18 = vsyncadd [#allocation3], %s17
      %s19 = sshll.u32 [#allocation2], 4
      %s20 = int_to_ptr.vmem [resolvable:$true] %s19
      %25 = dma.hbm_to_vmem [thread:$0]  %s1, 3136, %s20, [#allocation3], 64, 64, 4
    $region9: #{cmnist_mlp_forward.1} parent=1 // pred_fallthru
      _
    // Predicated region
    $region10: #{cmnist_mlp_forward.1} parent=1 // pred_check
      _
    $region11: #{cmnist_mlp_forward.1} parent=1 // pred_check_branch
      %27 = sbr.rel (0) target = $region13
    $region12: #{cmnist_mlp_forward.1} parent=1 // pred_region
      _
    $region13: #{cmnist_mlp_forward.1} parent=1 // pred_fallthru
      _
    // Predicated region
    $region14: #{cmnist_mlp_forward.1} parent=1 // pred_check
      _
    $region15: #{cmnist_mlp_forward.1} parent=1 // pred_check_branch
      %29 = sbr.rel (0) target = $region17
    $region16: #{cmnist_mlp_forward.1} parent=1 // pred_region
      _
    $region17: #{cmnist_mlp_forward.1} parent=1 // pred_fallthru
      _
    // Predicated region
    $region18: #{cmnist_mlp_forward.1} parent=1 // pred_check
      _
    $region19: #{cmnist_mlp_forward.1} parent=1 // pred_check_branch
      %31 = sbr.rel (0) target = $region21
    $region20: #{cmnist_mlp_forward.1} parent=1 // pred_region
      _
    $region21: #{cmnist_mlp_forward.1} parent=1 // pred_fallthru
      _
    // Predicated region
    $region22: #{cmnist_mlp_forward.1} parent=1 // pred_check
      _
    $region23: #{cmnist_mlp_forward.1} parent=1 // pred_check_branch
      %33 = sbr.rel (0) target = $region25
    $region24: #{cmnist_mlp_forward.1} parent=1 // pred_region
      %34 = dma.done [#allocation3], 3136
    $region25: #{cmnist_mlp_forward.1} parent=1 // pred_fallthru
      _
    %v36 = vld [vmem:[%s0] sm:$0xff]
    %v38 = vcombine.high %v36, %v36
    %v40 = vunpack.c.l.s4 1983009808
    %v41 = vunpack.c.0.s8 %v40
    %v42 = vlaneseq
    %v43 = vshrl.u32 %v42, 7
    %v44 = vsub.s32 %v41, %v43
    %v45 = vrot.slane %v36, %v44
    %v47 = vunpack.c.l.s4 1983009808
    %v48 = vunpack.c.0.s8 %v47
    %v49 = vlaneseq
    %v50 = vshrl.u32 %v49, 7
    %v51 = vsub.s32 %v48, %v50
    %v52 = vrot.slane %v38, %v51
    %v53 = vcombine.high %v45, %v45
    %v54 = vcombine.high %v52, %v52
    %v59 = vpack.c.bf16 %v45, %v45
    %v60 = vpack.c.bf16 %v53, %v53
    %v61 = vpack.c.bf16 %v52, %v52
    %v62 = vpack.c.bf16 %v54, %v54
    %v63 = vld [vmem:[#allocation2] sm:$0xf]
    %v64 = vld [vmem:[#allocation2 + $0x4] sm:$0xf]
    %v65 = vld [vmem:[#allocation2 + $0x8] sm:$0xf]
    %v66 = vld [vmem:[#allocation2 + $0xc] sm:$0xf]
    %v67 = vld [vmem:[#allocation2 + $0x10] sm:$0xf]
    %v68 = vld [vmem:[#allocation2 + $0x14] sm:$0xf]
    %v69 = vld [vmem:[#allocation2 + $0x18] sm:$0xf]
    %v70 = vld [vmem:[#allocation2 + $0x1c] sm:$0xf]
    %v71 = vld [vmem:[#allocation2 + $0x20] sm:$0xf]
    %v72 = vld [vmem:[#allocation2 + $0x24] sm:$0xf]
    %v73 = vld [vmem:[#allocation2 + $0x28] sm:$0xf]
    %v74 = vld [vmem:[#allocation2 + $0x2c] sm:$0xf]
    %v75 = vld [vmem:[#allocation2 + $0x30] sm:$0xf]
    %v76 = vld [vmem:[#allocation2 + $0x34] sm:$0xf]
    %v77 = vld [vmem:[#allocation2 + $0x38] sm:$0xf]
    %v78 = vld [vmem:[#allocation2 + $0x3c] sm:$0xf]
    %v79 = vld [vmem:[#allocation2 + $0x40] sm:$0xf]
    %v80 = vld [vmem:[#allocation2 + $0x44] sm:$0xf]
    %v81 = vld [vmem:[#allocation2 + $0x48] sm:$0xf]
    %v82 = vld [vmem:[#allocation2 + $0x4c] sm:$0xf]
    %v83 = vld [vmem:[#allocation2 + $0x50] sm:$0xf]
    %v84 = vld [vmem:[#allocation2 + $0x54] sm:$0xf]
    %v85 = vld [vmem:[#allocation2 + $0x58] sm:$0xf]
    %v86 = vld [vmem:[#allocation2 + $0x5c] sm:$0xf]
    %v87 = vld [vmem:[#allocation2 + $0x60] sm:$0xf]
    %v88 = vld [vmem:[#allocation2 + $0x64] sm:$0xf]
    %v89 = vld [vmem:[#allocation2 + $0x68] sm:$0xf]
    %v90 = vld [vmem:[#allocation2 + $0x6c] sm:$0xf]
    %v91 = vld [vmem:[#allocation2 + $0x70] sm:$0xf]
    %v92 = vld [vmem:[#allocation2 + $0x74] sm:$0xf]
    %v93 = vld [vmem:[#allocation2 + $0x78] sm:$0xf]
    %v94 = vld [vmem:[#allocation2 + $0x7c] sm:$0xf]
    %v95 = vld [vmem:[#allocation2 + $0x80] sm:$0xf]
    %v96 = vld [vmem:[#allocation2 + $0x84] sm:$0xf]
    %v97 = vld [vmem:[#allocation2 + $0x88] sm:$0xf]
    %v98 = vld [vmem:[#allocation2 + $0x8c] sm:$0xf]
    %v99 = vld [vmem:[#allocation2 + $0x90] sm:$0xf]
    %v100 = vld [vmem:[#allocation2 + $0x94] sm:$0xf]
    %v101 = vld [vmem:[#allocation2 + $0x98] sm:$0xf]
    %v102 = vld [vmem:[#allocation2 + $0x9c] sm:$0xf]
    %v103 = vld [vmem:[#allocation2 + $0xa0] sm:$0xf]
    %v104 = vld [vmem:[#allocation2 + $0xa4] sm:$0xf]
    %v105 = vld [vmem:[#allocation2 + $0xa8] sm:$0xf]
    %v106 = vld [vmem:[#allocation2 + $0xac] sm:$0xf]
    %v107 = vld [vmem:[#allocation2 + $0xb0] sm:$0xf]
    %v108 = vld [vmem:[#allocation2 + $0xb4] sm:$0xf]
    %v109 = vld [vmem:[#allocation2 + $0xb8] sm:$0xf]
    %v110 = vld [vmem:[#allocation2 + $0xbc] sm:$0xf]
    %v111 = vld [vmem:[#allocation2 + $0xc0] sm:$0xf]
    %v112 = vld [vmem:[%s2] sm:$0x1]
    %v114 = vlaneseq
    %v115 = vshrl.u32 %v114, 7
    %v116 = vsub.s32 0, %v115
    %v117 = vrot.slane %v112, %v116
    %v168 = vunpack.c.l.b16 %v63
    %v169 = vunpack.c.l.b16 %v64
    %v170 = vunpack.c.l.b16 %v65
    %v171 = vunpack.c.l.b16 %v66
    %v172 = vunpack.c.l.b16 %v67
    %v173 = vunpack.c.l.b16 %v68
    %v174 = vunpack.c.l.b16 %v69
    %v175 = vunpack.c.l.b16 %v70
    %v176 = vunpack.c.l.b16 %v71
    %v177 = vunpack.c.l.b16 %v72
    %v178 = vunpack.c.l.b16 %v73
    %v179 = vunpack.c.l.b16 %v74
    %v180 = vunpack.c.l.b16 %v75
    %v181 = vunpack.c.l.b16 %v76
    %v182 = vunpack.c.l.b16 %v77
    %v183 = vunpack.c.l.b16 %v78
    %v184 = vunpack.c.l.b16 %v79
    %v185 = vunpack.c.l.b16 %v80
    %v186 = vunpack.c.l.b16 %v81
    %v187 = vunpack.c.l.b16 %v82
    %v188 = vunpack.c.l.b16 %v83
    %v189 = vunpack.c.l.b16 %v84
    %v190 = vunpack.c.l.b16 %v85
    %v191 = vunpack.c.l.b16 %v86
    %v192 = vunpack.c.l.b16 %v87
    %v193 = vunpack.c.l.b16 %v88
    %v194 = vunpack.c.l.b16 %v89
    %v195 = vunpack.c.l.b16 %v90
    %v196 = vunpack.c.l.b16 %v91
    %v197 = vunpack.c.l.b16 %v92
    %v198 = vunpack.c.l.b16 %v93
    %v199 = vunpack.c.l.b16 %v94
    %v200 = vunpack.c.l.b16 %v95
    %v201 = vunpack.c.l.b16 %v96
    %v202 = vunpack.c.l.b16 %v97
    %v203 = vunpack.c.l.b16 %v98
    %v204 = vunpack.c.l.b16 %v99
    %v205 = vunpack.c.l.b16 %v100
    %v206 = vunpack.c.l.b16 %v101
    %v207 = vunpack.c.l.b16 %v102
    %v208 = vunpack.c.l.b16 %v103
    %v209 = vunpack.c.l.b16 %v104
    %v210 = vunpack.c.l.b16 %v105
    %v211 = vunpack.c.l.b16 %v106
    %v212 = vunpack.c.l.b16 %v107
    %v213 = vunpack.c.l.b16 %v108
    %v214 = vunpack.c.l.b16 %v109
    %v215 = vunpack.c.l.b16 %v110
    %v216 = vunpack.c.l.b16 %v111
    %v217 = vpack.c.b16 %v169, %v168
    %v218 = vpack.c.b16 %v171, %v170
    %v219 = vpack.c.b16 %v173, %v172
    %v220 = vpack.c.b16 %v175, %v174
    %v221 = vpack.c.b16 %v177, %v176
    %v222 = vpack.c.b16 %v179, %v178
    %v223 = vpack.c.b16 %v181, %v180
    %v224 = vpack.c.b16 %v183, %v182
    %v225 = vpack.c.b16 %v185, %v184
    %v226 = vpack.c.b16 %v187, %v186
    %v227 = vpack.c.b16 %v189, %v188
    %v228 = vpack.c.b16 %v191, %v190
    %v229 = vpack.c.b16 %v193, %v192
    %v230 = vpack.c.b16 %v195, %v194
    %v231 = vpack.c.b16 %v197, %v196
    %v232 = vpack.c.b16 %v199, %v198
    %v233 = vpack.c.b16 %v201, %v200
    %v234 = vpack.c.b16 %v203, %v202
    %v235 = vpack.c.b16 %v205, %v204
    %v236 = vpack.c.b16 %v207, %v206
    %v237 = vpack.c.b16 %v209, %v208
    %v238 = vpack.c.b16 %v211, %v210
    %v239 = vpack.c.b16 %v213, %v212
    %v240 = vpack.c.b16 %v215, %v214
    %v241 = vpack.c.b16 %v216, %v216
    %vm266 = vcmask 64512
    %v268 = vsel %vm266, %v62, 0
    %vm270 = vcmask 1043456
    %v272 = vsel %vm270, %v241, 0
    %274 = vmatprep.subr.bf16.mxu0 0
    %275 = vmatpush1.bf16.msra.mxu0 %v217
    %276 = vmatprep.subr.bf16.mxu0 0
    %277 = vmatpush1.bf16.msra.mxu0 %v218
    %278 = vmatprep.subr.bf16.mxu0 0
    %279 = vmatpush1.bf16.msra.mxu0 %v219
    %280 = vmatprep.subr.bf16.mxu0 0
    %281 = vmatpush1.bf16.msra.mxu0 %v220
    %282 = vmatprep.subr.bf16.mxu0 0
    %283 = vmatpush1.bf16.msra.mxu0 %v221
    %284 = vmatprep.subr.bf16.mxu0 0
    %285 = vmatpush1.bf16.msra.mxu0 %v222
    %286 = vmatprep.subr.bf16.mxu0 0
    %287 = vmatpush1.bf16.msra.mxu0 %v223
    %288 = vmatprep.subr.bf16.mxu0 0
    %289 = vmatpush1.bf16.msra.mxu0 %v224
    %290 = vmatprep.subr.bf16.mxu0 0
    %291 = vmatpush1.bf16.msra.mxu0 %v225
    %292 = vmatprep.subr.bf16.mxu0 0
    %293 = vmatpush1.bf16.msra.mxu0 %v226
    %294 = vmatprep.subr.bf16.mxu0 0
    %295 = vmatpush1.bf16.msra.mxu0 %v227
    %296 = vmatprep.subr.bf16.mxu0 0
    %297 = vmatpush1.bf16.msra.mxu0 %v228
    %298 = vmatprep.subr.bf16.mxu0 0
    %299 = vmatpush1.bf16.msra.mxu0 %v229
    %300 = vmatprep.subr.bf16.mxu0 0
    %301 = vmatpush1.bf16.msra.mxu0 %v230
    %302 = vmatprep.subr.bf16.mxu0 0
    %303 = vmatpush1.bf16.msra.mxu0 %v231
    %304 = vmatprep.subr.bf16.mxu0 0
    %305 = vmatpush1.bf16.msra.mxu0 %v232
    %306 = vmatprep.mubr.bf16.mxu0 %v60
    %307 = vmatmul.mubr.bf16.gmra.mrb[0].mxu0 %v59
    %v308 = vpop.f32.mrb[0].mxu0
    %v309 = vadd.f32 %v117, %v308
    %v310 = vpop.f32.mrb[0].mxu0
    %v311 = vpop.f32.mrb[0].mxu0
    %v312 = vpop.f32.mrb[0].mxu0
    %313 = vdwg.mxu0
    %314 = vmatprep.subr.bf16.mxu0 0
    %315 = vmatpush1.bf16.msra.mxu0 %v233
    %316 = vmatprep.subr.bf16.mxu0 0
    %317 = vmatpush1.bf16.msra.mxu0 %v234
    %318 = vmatprep.subr.bf16.mxu0 0
    %319 = vmatpush1.bf16.msra.mxu0 %v235
    %320 = vmatprep.subr.bf16.mxu0 0
    %321 = vmatpush1.bf16.msra.mxu0 %v236
    %322 = vmatprep.subr.bf16.mxu0 0
    %323 = vmatpush1.bf16.msra.mxu0 %v237
    %324 = vmatprep.subr.bf16.mxu0 0
    %325 = vmatpush1.bf16.msra.mxu0 %v238
    %326 = vmatprep.subr.bf16.mxu0 0
    %327 = vmatpush1.bf16.msra.mxu0 %v239
    %328 = vmatprep.subr.bf16.mxu0 0
    %329 = vmatpush1.bf16.msra.mxu0 %v240
    %330 = vmatprep.subr.bf16.mxu0 0
    %331 = vmatpush1.bf16.msra.mxu0 %v272
    %332 = vmatprep.subr.bf16.mxu0 0
    %333 = vmatpush1.bf16.msra.mxu0 0
    %334 = vmatprep.subr.bf16.mxu0 0
    %335 = vmatpush1.bf16.msra.mxu0 0
    %336 = vmatprep.subr.bf16.mxu0 0
    %337 = vmatpush1.bf16.msra.mxu0 0
    %338 = vmatprep.subr.bf16.mxu0 0
    %339 = vmatpush1.bf16.msra.mxu0 0
    %340 = vmatprep.subr.bf16.mxu0 0
    %341 = vmatpush1.bf16.msra.mxu0 0
    %342 = vmatprep.subr.bf16.mxu0 0
    %343 = vmatpush1.bf16.msra.mxu0 0
    %344 = vmatprep.subr.bf16.mxu0 0
    %345 = vmatpush1.bf16.msra.mxu0 0
    %346 = vmatprep.mubr.bf16.mxu0 %v268
    %347 = vmatmul.mubr.bf16.gmra.mrb[0].mxu0 %v61
    %v348 = vpop.f32.mrb[0].mxu0
    %v349 = vadd.f32 %v309, %v348
    %v350 = vpop.f32.mrb[0].mxu0
    %v351 = vpop.f32.mrb[0].mxu0
    %v352 = vpop.f32.mrb[0].mxu0
    %353 = vdwg.mxu0
    %v354 = vmax.f32 %v349, 0.0
    %v355 = vpack.c.bf16 %v354, %v354
    %v356 = vld [vmem:[%s3] sm:$0xf]
    %v357 = vld [vmem:[%s3 + $0x4] sm:$0xf]
    %v358 = vld [vmem:[%s3 + $0x8] sm:$0xf]
    %v359 = vld [vmem:[%s3 + $0xc] sm:$0xf]
    %v360 = vld [vmem:[%s3 + $0x10] sm:$0xf]
    %v361 = vld [vmem:[%s3 + $0x14] sm:$0xf]
    %v362 = vld [vmem:[%s3 + $0x18] sm:$0xf]
    %v363 = vld [vmem:[%s3 + $0x1c] sm:$0xf]
    %v364 = vld [vmem:[%s3 + $0x20] sm:$0xf]
    %v365 = vld [vmem:[%s3 + $0x24] sm:$0xf]
    %v366 = vld [vmem:[%s3 + $0x28] sm:$0xf]
    %v367 = vld [vmem:[%s3 + $0x2c] sm:$0xf]
    %v368 = vld [vmem:[%s3 + $0x30] sm:$0xf]
    %v369 = vld [vmem:[%s3 + $0x34] sm:$0xf]
    %v370 = vld [vmem:[%s3 + $0x38] sm:$0xf]
    %v371 = vld [vmem:[%s3 + $0x3c] sm:$0xf]
    %v372 = vld [vmem:[%s4] sm:$0x1]
    %v374 = vlaneseq
    %v375 = vshrl.u32 %v374, 7
    %v376 = vsub.s32 0, %v375
    %v377 = vrot.slane %v372, %v376
    %v395 = vunpack.c.l.b16 %v356
    %v396 = vunpack.c.l.b16 %v357
    %v397 = vunpack.c.l.b16 %v358
    %v398 = vunpack.c.l.b16 %v359
    %v399 = vunpack.c.l.b16 %v360
    %v400 = vunpack.c.l.b16 %v361
    %v401 = vunpack.c.l.b16 %v362
    %v402 = vunpack.c.l.b16 %v363
    %v403 = vunpack.c.l.b16 %v364
    %v404 = vunpack.c.l.b16 %v365
    %v405 = vunpack.c.l.b16 %v366
    %v406 = vunpack.c.l.b16 %v367
    %v407 = vunpack.c.l.b16 %v368
    %v408 = vunpack.c.l.b16 %v369
    %v409 = vunpack.c.l.b16 %v370
    %v410 = vunpack.c.l.b16 %v371
    %v411 = vpack.c.b16 %v396, %v395
    %v412 = vpack.c.b16 %v398, %v397
    %v413 = vpack.c.b16 %v400, %v399
    %v414 = vpack.c.b16 %v402, %v401
    %v415 = vpack.c.b16 %v404, %v403
    %v416 = vpack.c.b16 %v406, %v405
    %v417 = vpack.c.b16 %v408, %v407
    %v418 = vpack.c.b16 %v410, %v409
    %427 = vmatprep.subr.bf16.mxu0 0
    %428 = vmatpush1.bf16.msra.mxu0 %v411
    %429 = vmatprep.subr.bf16.mxu0 0
    %430 = vmatpush1.bf16.msra.mxu0 %v412
    %431 = vmatprep.subr.bf16.mxu0 0
    %432 = vmatpush1.bf16.msra.mxu0 %v413
    %433 = vmatprep.subr.bf16.mxu0 0
    %434 = vmatpush1.bf16.msra.mxu0 %v414
    %435 = vmatprep.subr.bf16.mxu0 0
    %436 = vmatpush1.bf16.msra.mxu0 %v415
    %437 = vmatprep.subr.bf16.mxu0 0
    %438 = vmatpush1.bf16.msra.mxu0 %v416
    %439 = vmatprep.subr.bf16.mxu0 0
    %440 = vmatpush1.bf16.msra.mxu0 %v417
    %441 = vmatprep.subr.bf16.mxu0 0
    %442 = vmatpush1.bf16.msra.mxu0 %v418
    %443 = vmatprep.subr.bf16.mxu0 0
    %444 = vmatpush1.bf16.msra.mxu0 0
    %445 = vmatprep.subr.bf16.mxu0 0
    %446 = vmatpush1.bf16.msra.mxu0 0
    %447 = vmatprep.subr.bf16.mxu0 0
    %448 = vmatpush1.bf16.msra.mxu0 0
    %449 = vmatprep.subr.bf16.mxu0 0
    %450 = vmatpush1.bf16.msra.mxu0 0
    %451 = vmatprep.subr.bf16.mxu0 0
    %452 = vmatpush1.bf16.msra.mxu0 0
    %453 = vmatprep.subr.bf16.mxu0 0
    %454 = vmatpush1.bf16.msra.mxu0 0
    %455 = vmatprep.subr.bf16.mxu0 0
    %456 = vmatpush1.bf16.msra.mxu0 0
    %457 = vmatprep.subr.bf16.mxu0 0
    %458 = vmatpush1.bf16.msra.mxu0 0
    %459 = vmatprep.mubr.bf16.mxu0 0
    %460 = vmatmul.mubr.bf16.gmra.mrb[0].mxu0 %v355
    %v461 = vpop.f32.mrb[0].mxu0
    %v462 = vadd.f32 %v377, %v461
    %v463 = vpop.f32.mrb[0].mxu0
    %v464 = vpop.f32.mrb[0].mxu0
    %v465 = vpop.f32.mrb[0].mxu0
    %466 = vdwg.mxu0
    %v467 = vmax.f32 %v462, 0.0
    %468 = vst [vmem:[#allocation5] sm:$0x3] %v467
    // Predicated region
    $region26: #{cmnist_mlp_forward.1} parent=1 // pred_check
      _
    $region27: #{cmnist_mlp_forward.1} parent=1 // pred_check_branch
      %470 = sbr.rel (0) target = $region29
    $region28: #{cmnist_mlp_forward.1} parent=1 // pred_region
      %s472 = ssub.s32 32, 32
      %473 = vsyncadd [#allocation4], %s472
      %s475 = sshll.u32 [#allocation5], 4
      %s476 = int_to_ptr.vmem [resolvable:$true] %s475
      %478 = dma.vmem_to_hbm [thread:$0]  %s476, 32, %s5, [#allocation4]
    $region29: #{cmnist_mlp_forward.1} parent=1 // pred_fallthru
      _
    // Predicated region
    $region30: #{cmnist_mlp_forward.1} parent=1 // pred_check
      _
    $region31: #{cmnist_mlp_forward.1} parent=1 // pred_check_branch
      %480 = sbr.rel (0) target = $region33
    $region32: #{cmnist_mlp_forward.1} parent=1 // pred_region
      %481 = dma.done [#allocation4], 32
    $region33: #{cmnist_mlp_forward.1} parent=1 // pred_fallthru
      _
    %482 = vsyncpa [#allocation3], 1
    %483 = vsyncpa [#allocation4], 1

</llo_original>
